<compile_context>
chip_gen: v6e
topology: v6e:2x2x1
jax: 0.10.0
libtpu: 0.0.40
codegen_flags: <defaults>
</compile_context>

<pallas_src>
import functools

import jax
import jax.numpy as jnp
from jax.experimental import pallas as pl
from jax.experimental.pallas import tpu as pltpu

EPS = 1e-5  # torch.nn.LayerNorm default eps


def _round_up(n, m):
    return ((n + m - 1) // m) * m


def _vmem_budget_bytes():
    """Scoped-VMEM budget per generation: 64 MiB on 128 MiB parts (v5e/v6e),
    ~44 MiB on the 64 MiB v7x part. Falls back to v6e numbers off-TPU."""
    cap = 128 * 1024 * 1024
    try:
        info = pltpu.get_tpu_info()
        cap = int(getattr(info, "vmem_capacity_bytes", cap) or cap)
    except Exception:
        pass
    if cap >= 96 * 1024 * 1024:
        return 64 * 1024 * 1024
    return min(44 * 1024 * 1024, (cap * 3) // 4)


def _node_bytes_per_row(node_dim, hidden):
    # double-buffered bf16 input block (lane-padded) + double-buffered bf16 output
    # + f32 accumulator / LayerNorm temporaries.
    nd = max(128, node_dim)
    return 2 * (nd * 2 + hidden * 2) + 8 * hidden


def _edge_bytes_per_row(hidden, num_attr):
    # (te,1) f32 pos block lane-pads to 128 lanes; A bf16 embedding blocks; bf16
    # output block; all double-buffered; plus f32 acc/LN temporaries.
    return 2 * (128 * 4 + num_attr * hidden * 2 + hidden * 2) + 8 * hidden


def _row_tile(n_rows, bytes_per_row, vmem_budget, cap=8192):
    """Largest multiple-of-8 row tile that keeps pipelined buffers within ~half of
    the scoped VMEM budget (rest: resident weights + compiler scratch)."""
    fit = max(8, (vmem_budget // 2) // max(1, bytes_per_row))
    fit = min(fit, cap)
    fit = (fit // 8) * 8
    return max(8, min(fit, _round_up(n_rows, 8)))


def _layernorm_f32(h, gamma, beta):
    # two-pass (centered) variance in f32: numerically safe vs the one-pass form.
    mean = jnp.mean(h, axis=-1, keepdims=True)
    c = h - mean
    var = jnp.mean(c * c, axis=-1, keepdims=True)
    return c * jax.lax.rsqrt(var + EPS) * gamma + beta


# ---------------------------------------------------------------------------
# Kernel 1: NodeTransform = Linear(node_dim -> hidden) + LayerNorm(hidden)
# ---------------------------------------------------------------------------
def node_transform_kernel(x_ref, w_ref, b_ref, g_ref, bt_ref, o_ref):
    h = jnp.dot(x_ref[...], w_ref[...], preferred_element_type=jnp.float32)
    h = h + b_ref[...]
    o_ref[...] = _layernorm_f32(h, g_ref[...], bt_ref[...]).astype(o_ref.dtype)


# ---------------------------------------------------------------------------
# Kernel 2: edge path.
#   reference:  LN( (concat(emb_0..emb_{A-1}) + tile(pe, A)) @ W + b )
#   kernel:     LN(  sum_a emb_a @ W[a*h:(a+1)*h]  +  pe @ W_pe  + b )
#               with W_pe = sum_a W[a*h:(a+1)*h]   (identical algebra)
# ---------------------------------------------------------------------------
def edge_transform_kernel(*refs, num_attr):
    o_ref = refs[-1]
    pos_ref = refs[0]
    emb_refs = refs[1:1 + num_attr]
    rest = refs[1 + num_attr:-1]
    if num_attr > 0:
        freq_ref, phase_ref, wpe_ref, w_ref, b_ref, g_ref, bt_ref = rest
    else:
        freq_ref, phase_ref, wpe_ref, b_ref, g_ref, bt_ref = rest
        w_ref = None

    hdim = wpe_ref.shape[0]

    # Lane-dense positional encoding: sin(x + pi/2) == cos(x) replaces the
    # concat([sin, cos]) (no XLU concat). Computed in f32, fed to the MXU in bf16.
    pe = jnp.sin(pos_ref[...] * freq_ref[...] + phase_ref[...])          # (TE, h) f32

    acc = jnp.dot(pe.astype(wpe_ref.dtype), wpe_ref[...],
                  preferred_element_type=jnp.float32)
    acc = acc + b_ref[...]
    for a in range(num_attr):                                            # static unroll
        acc = acc + jnp.dot(emb_refs[a][...],
                            w_ref[a * hdim:(a + 1) * hdim, :],
                            preferred_element_type=jnp.float32)
    # TODO(synk): once HBM-bound traffic is gone (gather fusion), merge these A+1
    # K=128 dots into one K=(A+1)*128 dot via a VMEM staging scratch (v6e MXU fill /
    # v7x MRB in-place accumulation).

    o_ref[...] = _layernorm_f32(acc, g_ref[...], bt_ref[...]).astype(o_ref.dtype)


class FirstViewPreLayer:
    """JAX/Pallas port of the PyTorch FirstViewPreLayer."""

    def __init__(self, node_dim, edge_dim, hidden_dim=64, key=None,
                 out_dtype=jnp.bfloat16):
        self.node_dim = node_dim
        self.edge_dim = edge_dim
        self.hidden = hidden_dim
        self.num_attr = edge_dim - 1
        self.out_dtype = out_dtype
        if key is None:
            key = jax.random.PRNGKey(0)
        k = jax.random.split(key, 8)

        h = hidden_dim
        # NOTE: hidden not a multiple of 128 still runs (block == full array dim)
        # but forces masked partial stores; prefer hidden % 128 == 0 for perf.
        edge_in = h * self.num_attr if self.num_attr > 0 else h

        # Deterministic synthetic parameters (weights stored as (in, out)).
        # Matmul operands / embedding tables in bf16 (memory-bound kernels);
        # bias / gamma / beta stay f32 (LayerNorm math is f32).
        self.params = {
            "node_w": (0.05 * jax.random.normal(k[0], (node_dim, h), jnp.float32)
                       ).astype(jnp.bfloat16),
            "node_b": 0.01 * jax.random.normal(k[1], (1, h), jnp.float32),
            "node_gamma": jnp.ones((1, h), jnp.float32),
            "node_beta": jnp.zeros((1, h), jnp.float32),
            "edge_w": (0.05 * jax.random.normal(k[2], (edge_in, h), jnp.float32)
                       ).astype(jnp.bfloat16),
            "edge_b": 0.01 * jax.random.normal(k[3], (1, h), jnp.float32),
            "edge_gamma": jnp.ones((1, h), jnp.float32),
            "edge_beta": jnp.zeros((1, h), jnp.float32),
            # nn.Embedding(10000, hidden) per edge attribute, stored bf16.
            "attr_tables": [
                (0.1 * jax.random.normal(k[4 + i % 4], (10000, h), jnp.float32)
                 ).astype(jnp.bfloat16)
                for i in range(self.num_attr)
            ],
        }

        # PositionalEncoding: standard sinusoidal:
        #   freq = base^linspace(0,1,hidden/2), base = 1e-4,
        #   out  = cat([sin(pos*freq), cos(pos*freq)], -1)
        half = h // 2
        freq_half = (1e-4 ** jnp.linspace(0.0, 1.0, half)).astype(jnp.float32)
        self.freq = freq_half.reshape(1, half)                      # for the reference
        # Full-width single-sin form: sin(pos*freq_full + phase) == [sin, cos].
        self.freq_full = jnp.concatenate([freq_half, freq_half]).reshape(1, h)
        self.phase = jnp.concatenate(
            [jnp.zeros((half,), jnp.float32),
             jnp.full((half,), jnp.pi / 2, jnp.float32)]).reshape(1, h)

        # Fold the pe tiling into the weight: tile(pe, A) @ W == pe @ sum_a W_a.
        ew_f32 = self.params["edge_w"].astype(jnp.float32)
        if self.num_attr > 0:
            blocks = [ew_f32[i * h:(i + 1) * h] for i in range(self.num_attr)]
            self.w_pe = functools.reduce(jnp.add, blocks).astype(jnp.bfloat16)
        else:
            self.w_pe = self.params["edge_w"]

    # -------------------- Pallas-backed forward --------------------
    def __call__(self, x_s, edge_attr_s):
        p = self.params
        N, node_dim = x_s.shape
        E = edge_attr_s.shape[0]
        h = self.hidden
        num_attr = self.num_attr

        vmem_budget = _vmem_budget_bytes()
        cparams = pltpu.CompilerParams(
            dimension_semantics=("parallel",),   # shards the row grid across TCs on v7x
            vmem_limit_bytes=vmem_budget,
        )

        # ---- node path: row-tiled grid, weights resident ----
        x_bf16 = x_s.astype(jnp.bfloat16)
        tn = _row_tile(N, _node_bytes_per_row(node_dim, h), vmem_budget)
        h_x = pl.pallas_call(
            node_transform_kernel,
            out_shape=jax.ShapeDtypeStruct((N, h), self.out_dtype),
            grid=(pl.cdiv(N, tn),),
            in_specs=[
                pl.BlockSpec((tn, node_dim), lambda i: (i, 0)),
                pl.BlockSpec((node_dim, h), lambda i: (0, 0)),
                pl.BlockSpec((1, h), lambda i: (0, 0)),
                pl.BlockSpec((1, h), lambda i: (0, 0)),
                pl.BlockSpec((1, h), lambda i: (0, 0)),
            ],
            out_specs=pl.BlockSpec((tn, h), lambda i: (i, 0)),
            compiler_params=cparams,
        )(x_bf16, p["node_w"], p["node_b"], p["node_gamma"], p["node_beta"])

        # ---- edge path ----
        pos = edge_attr_s[:, 0].astype(jnp.float32).reshape(E, 1)

        # TODO(synk): fuse this data-dependent nn.Embedding gather into the edge
        # kernel (scalar-prefetched indices in SMEM + per-row HBM->VMEM DMA from
        # pl.ANY tables); kept as JAX glue here — bf16 tables already halve the
        # materialize/re-read round trip.
        embs = [
            jnp.take(p["attr_tables"][i], edge_attr_s[:, i + 1], axis=0)
            for i in range(num_attr)
        ]

        te = _row_tile(E, _edge_bytes_per_row(h, num_attr), vmem_budget)

        def row_spec(cols):
            return pl.BlockSpec((te, cols), lambda i: (i, 0))

        def const_spec(rows, cols):
            return pl.BlockSpec((rows, cols), lambda i: (0, 0))

        edge_inputs = [pos] + embs + [self.freq_full, self.phase, self.w_pe]
        in_specs = ([row_spec(1)] + [row_spec(h)] * num_attr +
                    [const_spec(1, h), const_spec(1, h), const_spec(h, h)])
        if num_attr > 0:
            edge_inputs.append(p["edge_w"])
            in_specs.append(const_spec(h * num_attr, h))
        edge_inputs += [p["edge_b"], p["edge_gamma"], p["edge_beta"]]
        in_specs += [const_spec(1, h), const_spec(1, h), const_spec(1, h)]

        h_e = pl.pallas_call(
            functools.partial(edge_transform_kernel, num_attr=num_attr),
            out_shape=jax.ShapeDtypeStruct((E, h), self.out_dtype),
            grid=(pl.cdiv(E, te),),
            in_specs=in_specs,
            out_specs=pl.BlockSpec((te, h), lambda i: (i, 0)),
            compiler_params=cparams,
        )(*edge_inputs)

        return h_x, h_e

    # -------------------- pure-JAX reference (f32 math, PyTorch-faithful) -----
    def reference(self, x_s, edge_attr_s):
        p = self.params
        f32 = jnp.float32
        node_w = p["node_w"].astype(f32)
        edge_w = p["edge_w"].astype(f32)

        h_x = _layernorm_f32(x_s.astype(f32) @ node_w + p["node_b"],
                             p["node_gamma"], p["node_beta"])

        pos = edge_attr_s[:, 0].astype(f32).reshape(-1, 1)
        ang = pos * self.freq
        pe = jnp.concatenate([jnp.sin(ang), jnp.cos(ang)], axis=-1)
        if self.num_attr > 0:
            pos_vec = jnp.tile(pe, (1, self.num_attr))
            embs = [
                jnp.take(p["attr_tables"][i], edge_attr_s[:, i + 1], axis=0).astype(f32)
                for i in range(self.num_attr)
            ]
            edge_emb = jnp.concatenate(embs, axis=1) + pos_vec
        else:
            edge_emb = pe
        h_e = _layernorm_f32(edge_emb @ edge_w + p["edge_b"],
                             p["edge_gamma"], p["edge_beta"])
        return h_x, h_e


if __name__ == "__main__":
    # Small deterministic example (hidden=128 keeps the output lane-dense).
    NODE_DIM, EDGE_DIM, HIDDEN = 16, 3, 128   # num_attr = 2
    N_NODES, N_EDGES = 16, 16

    key = jax.random.PRNGKey(0)
    k_x, k_e, k_p = jax.random.split(key, 3)

    x_s = jax.random.normal(k_x, (N_NODES, NODE_DIM), jnp.float32)
    edge_attr_s = jax.random.randint(k_e, (N_EDGES, EDGE_DIM), 0, 100, jnp.int32)

    layer = FirstViewPreLayer(NODE_DIM, EDGE_DIM, HIDDEN, key=k_p)

    h_x, h_e = layer(x_s, edge_attr_s)
    h_x = jax.block_until_ready(h_x)
    h_e = jax.block_until_ready(h_e)

    # correctness check against the pure-JAX f32 reference (bf16 I/O tolerance)
    rx, re = layer.reference(x_s, edge_attr_s)
    assert h_x.shape == (N_NODES, HIDDEN) and h_e.shape == (N_EDGES, HIDDEN)
    assert jnp.allclose(h_x.astype(jnp.float32), rx, atol=8e-2, rtol=8e-2)
    assert jnp.allclose(h_e.astype(jnp.float32), re, atol=8e-2, rtol=8e-2)

    print("KERNEL_OK")
</pallas_src>

<mosaic_0001>
module attributes {stable_mosaic.version = 11 : i64} {
  func.func @node_transform_kernel(%arg0: i32, %arg1: memref<16x16xbf16, #tpu.memory_space<vmem>>, %arg2: memref<16x128xbf16, #tpu.memory_space<vmem>>, %arg3: memref<1x128xf32, #tpu.memory_space<vmem>>, %arg4: memref<1x128xf32, #tpu.memory_space<vmem>>, %arg5: memref<1x128xf32, #tpu.memory_space<vmem>>, %arg6: memref<16x128xbf16, #tpu.memory_space<vmem>>) attributes {dimension_semantics = [#tpu.dimension_semantics<parallel>], iteration_bounds = array<i64: 1>, scalar_prefetch = 0 : i64, scratch_operands = 0 : i64, tpu.core_type = #tpu.core_type<tc>, window_params = [{transform_indices = @transform_0, window_bounds = array<i64: 16, 16>}, {pipeline_mode = #tpu.pipeline_mode<synchronous>, transform_indices = @transform_1, window_bounds = array<i64: 16, 128>}, {pipeline_mode = #tpu.pipeline_mode<synchronous>, transform_indices = @transform_2, window_bounds = array<i64: 1, 128>}, {pipeline_mode = #tpu.pipeline_mode<synchronous>, transform_indices = @transform_3, window_bounds = array<i64: 1, 128>}, {pipeline_mode = #tpu.pipeline_mode<synchronous>, transform_indices = @transform_4, window_bounds = array<i64: 1, 128>}, {transform_indices = @transform_5, window_bounds = array<i64: 16, 128>}]} {
    %c0 = arith.constant 0 : index
    %c0_0 = arith.constant 0 : index
    %0 = vector.load %arg1[%c0, %c0_0] : memref<16x16xbf16, #tpu.memory_space<vmem>>, vector<16x16xbf16>
    %c0_1 = arith.constant 0 : index
    %c0_2 = arith.constant 0 : index
    %1 = vector.load %arg2[%c0_1, %c0_2] : memref<16x128xbf16, #tpu.memory_space<vmem>>, vector<16x128xbf16>
    %cst = arith.constant dense<0.000000e+00> : vector<16x128xf32>
    %2 = tpu.matmul %0, %1, %cst {dimension_numbers = #tpu.dot_dimension_numbers<[1], [0], [0], [1], [0, 0, 1, 1], [], []>} : vector<16x16xbf16>, vector<16x128xbf16>, vector<16x128xf32> -> vector<16x128xf32>
    %c0_3 = arith.constant 0 : index
    %c0_4 = arith.constant 0 : index
    %3 = vector.load %arg3[%c0_3, %c0_4] : memref<1x128xf32, #tpu.memory_space<vmem>>, vector<1x128xf32>
    %4 = vector.broadcast %3 : vector<1x128xf32> to vector<16x128xf32>
    %5 = arith.addf %2, %4 : vector<16x128xf32>
    %c0_5 = arith.constant 0 : index
    %c0_6 = arith.constant 0 : index
    %6 = vector.load %arg4[%c0_5, %c0_6] : memref<1x128xf32, #tpu.memory_space<vmem>>, vector<1x128xf32>
    %c0_7 = arith.constant 0 : index
    %c0_8 = arith.constant 0 : index
    %7 = vector.load %arg5[%c0_7, %c0_8] : memref<1x128xf32, #tpu.memory_space<vmem>>, vector<1x128xf32>
    %cst_9 = arith.constant dense<0.000000e+00> : vector<16xf32>
    %8 = vector.multi_reduction <add>, %5, %cst_9 [1] : vector<16x128xf32> to vector<16xf32>
    %9 = vector.shape_cast %8 : vector<16xf32> to vector<16x1xf32>
    %cst_10 = arith.constant 1.280000e+02 : f32
    %10 = vector.broadcast %cst_10 : f32 to vector<16x1xf32>
    %11 = arith.divf %9, %10 : vector<16x1xf32>
    %12 = vector.broadcast %11 : vector<16x1xf32> to vector<16x128xf32>
    %13 = arith.subf %5, %12 : vector<16x128xf32>
    %14 = arith.mulf %13, %13 : vector<16x128xf32>
    %cst_11 = arith.constant dense<0.000000e+00> : vector<16xf32>
    %15 = vector.multi_reduction <add>, %14, %cst_11 [1] : vector<16x128xf32> to vector<16xf32>
    %16 = vector.shape_cast %15 : vector<16xf32> to vector<16x1xf32>
    %cst_12 = arith.constant 1.280000e+02 : f32
    %17 = vector.broadcast %cst_12 : f32 to vector<16x1xf32>
    %18 = arith.divf %16, %17 : vector<16x1xf32>
    %cst_13 = arith.constant 9.99999974E-6 : f32
    %19 = vector.broadcast %cst_13 : f32 to vector<16x1xf32>
    %20 = arith.addf %18, %19 : vector<16x1xf32>
    %21 = math.rsqrt %20 : vector<16x1xf32>
    %22 = vector.broadcast %21 : vector<16x1xf32> to vector<16x128xf32>
    %23 = arith.mulf %13, %22 : vector<16x128xf32>
    %24 = vector.broadcast %6 : vector<1x128xf32> to vector<16x128xf32>
    %25 = arith.mulf %23, %24 : vector<16x128xf32>
    %26 = vector.broadcast %7 : vector<1x128xf32> to vector<16x128xf32>
    %27 = arith.addf %25, %26 : vector<16x128xf32>
    %28 = arith.truncf %27 : vector<16x128xf32> to vector<16x128xbf16>
    %c0_14 = arith.constant 0 : index
    %c0_15 = arith.constant 0 : index
    %29 = vector.load %arg6[%c0_14, %c0_15] : memref<16x128xbf16, #tpu.memory_space<vmem>>, vector<16x128xbf16>
    tpu.vector_store %arg6[%c0_14, %c0_15], %28 {strides = array<i32>} : memref<16x128xbf16, #tpu.memory_space<vmem>>, vector<16x128xbf16>,
    return
  }
  func.func @transform_0(%arg0: i32) -> (i32, i32) {
    %c0_i32 = arith.constant 0 : i32
    %c0_i32_0 = arith.constant 0 : i32
    return %arg0, %c0_i32 : i32, i32
  }
  func.func @transform_1(%arg0: i32) -> (i32, i32) {
    %c0_i32 = arith.constant 0 : i32
    %c0_i32_0 = arith.constant 0 : i32
    %c0_i32_1 = arith.constant 0 : i32
    return %c0_i32, %c0_i32_0 : i32, i32
  }
  func.func @transform_2(%arg0: i32) -> (i32, i32) {
    %c0_i32 = arith.constant 0 : i32
    %c0_i32_0 = arith.constant 0 : i32
    %c0_i32_1 = arith.constant 0 : i32
    return %c0_i32, %c0_i32_0 : i32, i32
  }
  func.func @transform_3(%arg0: i32) -> (i32, i32) {
    %c0_i32 = arith.constant 0 : i32
    %c0_i32_0 = arith.constant 0 : i32
    %c0_i32_1 = arith.constant 0 : i32
    return %c0_i32, %c0_i32_0 : i32, i32
  }
  func.func @transform_4(%arg0: i32) -> (i32, i32) {
    %c0_i32 = arith.constant 0 : i32
    %c0_i32_0 = arith.constant 0 : i32
    %c0_i32_1 = arith.constant 0 : i32
    return %c0_i32, %c0_i32_0 : i32, i32
  }
  func.func @transform_5(%arg0: i32) -> (i32, i32) {
    %c0_i32 = arith.constant 0 : i32
    %c0_i32_0 = arith.constant 0 : i32
    return %arg0, %c0_i32 : i32, i32
  }
}

</mosaic_0001>

<llo_original>
// kernel: tpu_custom_call.1
$region0: #{tpu_custom_call.1}
  #allocation0 [shape = 'u32[]', space=smem, size = 0x4, offset = 0x4, fixed_abs, tag = 'smem constant byte address 0x4 - core index']
  #allocation1 [shape = 'u32[144,128]{1,0:T(1,128)}', space=vmem, size = 0x12000, scoped, tag = 'internal scratch']
  %s0 = inlined_call_operand.hbm [shape: bf16[16,16], index: 0, kind: input, shape index: {}]
  %s1 = inlined_call_operand.hbm [shape: bf16[16,128], index: 1, kind: input, shape index: {}]
  %s2 = inlined_call_operand.vmem [shape: f32[1,128], index: 2, kind: input, shape index: {}]
  %s3 = inlined_call_operand.vmem [shape: f32[1,128], index: 3, kind: input, shape index: {}]
  %s4 = inlined_call_operand.vmem [shape: f32[1,128], index: 4, kind: input, shape index: {}]
  %s5 = inlined_call_operand.hbm [shape: bf16[16,128], index: 5, kind: output, shape index: {}]
  %s6 = sld [smem:[#allocation0]]
  $region38: #{tpu_custom_call.1} parent=0
    _
  %s8 = ssub.s32 1, %s6
  %s9 = scalar_select 0, %s8, %s6
  $region1: #{tpu_custom_call.1} parent=0
    #allocation2 [shape = 'u8[4096]{0}', space=vmem, size = 0x1000, scoped, tag = 'input window, operand 0, single buffered']
    #allocation3 [shape = 's32[1]{0}', space=sflag, size = 0x4, scoped, tag = 'scoped memory for tpu_custom_call.1']
    #allocation4 [shape = 's32[1]{0}', space=sflag, size = 0x4, scoped, tag = 'scoped memory for tpu_custom_call.1']
    #allocation5 [shape = 'u8[4096]{0}', space=vmem, size = 0x1000, scoped, tag = 'input window, operand 1, single buffered']
    #allocation6 [shape = 's32[1]{0}', space=sflag, size = 0x4, scoped, tag = 'scoped memory for tpu_custom_call.1']
    #allocation7 [shape = 'u8[4096]{0}', space=vmem, size = 0x1000, scoped, tag = 'output window, operand 0, single buffered']
    %10 = vsyncpa [#allocation3], 0
    %11 = vsyncpa [#allocation6], 0
    %12 = vsyncpa [#allocation4], 0
    // Predicated region
    $region2: #{tpu_custom_call.1} parent=1 // pred_check
      _
    $region3: #{tpu_custom_call.1} parent=1 // pred_check_branch
      %14 = sbr.rel (0) target = $region5
    $region4: #{tpu_custom_call.1} parent=1 // pred_region
      %s16 = ssub.s32 128, 128
      %17 = vsyncadd [#allocation3], %s16
      %s18 = sshll.u32 [#allocation2], 4
      %s19 = int_to_ptr.vmem [resolvable:$true] %s18
      %24 = dma.hbm_to_vmem [thread:$0]  %s0, 128, %s19, [#allocation3], 64, 64, 4
    $region5: #{tpu_custom_call.1} parent=1 // pred_fallthru
      _
    // Predicated region
    $region6: #{tpu_custom_call.1} parent=1 // pred_check
      _
    $region7: #{tpu_custom_call.1} parent=1 // pred_check_branch
      %26 = sbr.rel (0) target = $region9
    $region8: #{tpu_custom_call.1} parent=1 // pred_region
      %s28 = ssub.s32 128, 128
      %29 = vsyncadd [#allocation6], %s28
      %s30 = sshll.u32 [#allocation5], 4
      %s31 = int_to_ptr.vmem [resolvable:$true] %s30
      %36 = dma.hbm_to_vmem [thread:$0]  %s1, 128, %s31, [#allocation6], 64, 64, 4
    $region9: #{tpu_custom_call.1} parent=1 // pred_fallthru
      _
    // Predicated region
    $region10: #{tpu_custom_call.1} parent=1 // pred_check
      _
    $region11: #{tpu_custom_call.1} parent=1 // pred_check_branch
      %38 = sbr.rel (0) target = $region13
    $region12: #{tpu_custom_call.1} parent=1 // pred_region
      _
    $region13: #{tpu_custom_call.1} parent=1 // pred_fallthru
      _
    // Predicated region
    $region14: #{tpu_custom_call.1} parent=1 // pred_check
      _
    $region15: #{tpu_custom_call.1} parent=1 // pred_check_branch
      %40 = sbr.rel (0) target = $region17
    $region16: #{tpu_custom_call.1} parent=1 // pred_region
      _
    $region17: #{tpu_custom_call.1} parent=1 // pred_fallthru
      _
    // Predicated region
    $region18: #{tpu_custom_call.1} parent=1 // pred_check
      _
    $region19: #{tpu_custom_call.1} parent=1 // pred_check_branch
      %42 = sbr.rel (0) target = $region21
    $region20: #{tpu_custom_call.1} parent=1 // pred_region
      _
    $region21: #{tpu_custom_call.1} parent=1 // pred_fallthru
      _
    // Predicated region
    $region22: #{tpu_custom_call.1} parent=1 // pred_check
      _
    $region23: #{tpu_custom_call.1} parent=1 // pred_check_branch
      %44 = sbr.rel (0) target = $region25
    $region24: #{tpu_custom_call.1} parent=1 // pred_region
      %45 = dma.done [#allocation3], 128
    $region25: #{tpu_custom_call.1} parent=1 // pred_fallthru
      _
    // Predicated region
    $region26: #{tpu_custom_call.1} parent=1 // pred_check
      _
    $region27: #{tpu_custom_call.1} parent=1 // pred_check_branch
      %47 = sbr.rel (0) target = $region29
    $region28: #{tpu_custom_call.1} parent=1 // pred_region
      %48 = dma.done [#allocation6], 128
    $region29: #{tpu_custom_call.1} parent=1 // pred_fallthru
      _
    %v50 = vld [vmem:[#allocation2] sm:$0xf]
    %v51 = vld [vmem:[#allocation2 + $0x4] sm:$0xf]
    %v52 = vld [vmem:[#allocation5] sm:$0xf]
    %v53 = vld [vmem:[#allocation5 + $0x4] sm:$0xf]
    %v54 = vld [vmem:[%s2] sm:$0x1]
    %v56 = vlaneseq
    %v57 = vshrl.u32 %v56, 7
    %v58 = vsub.s32 0, %v57
    %v59 = vrot.slane %v54, %v58
    %v63 = vunpack.c.l.b16 %v50
    %v64 = vunpack.c.l.b16 %v51
    %v65 = vpack.c.b16 %v64, %v63
    %v68 = vunpack.c.l.b16 %v52
    %v69 = vunpack.c.l.b16 %v53
    %v70 = vpack.c.b16 %v69, %v68
    %vm72 = vcmask 130048
    %v74 = vsel %vm72, %v65, 0
    %76 = vmatprep.subr.bf16.mxu0 0
    %77 = vmatpush1.bf16.msra.mxu0 0
    %78 = vmatprep.subr.bf16.mxu0 0
    %79 = vmatpush1.bf16.msra.mxu0 0
    %80 = vmatprep.subr.bf16.mxu0 0
    %81 = vmatpush1.bf16.msra.mxu0 0
    %82 = vmatprep.subr.bf16.mxu0 0
    %83 = vmatpush1.bf16.msra.mxu0 0
    %84 = vmatprep.subr.bf16.mxu0 0
    %85 = vmatpush1.bf16.msra.mxu0 0
    %86 = vmatprep.subr.bf16.mxu0 0
    %87 = vmatpush1.bf16.msra.mxu0 0
    %88 = vmatprep.subr.bf16.mxu0 0
    %89 = vmatpush1.bf16.msra.mxu0 0
    %90 = vmatprep.subr.bf16.mxu0 0
    %91 = vmatpush1.bf16.msra.mxu0 %v70
    %92 = vmatprep.subr.bf16.mxu0 0
    %93 = vmatpush2.bf16.msra.mxu0 0
    %94 = vmatprep.subr.bf16.mxu0 0
    %95 = vmatpush2.bf16.msra.mxu0 0
    %96 = vmatprep.subr.bf16.mxu0 0
    %97 = vmatpush2.bf16.msra.mxu0 0
    %98 = vmatprep.subr.bf16.mxu0 0
    %99 = vmatpush2.bf16.msra.mxu0 0
    %100 = vmatprep.subr.bf16.mxu0 0
    %101 = vmatpush2.bf16.msra.mxu0 0
    %102 = vmatprep.subr.bf16.mxu0 0
    %103 = vmatpush2.bf16.msra.mxu0 0
    %104 = vmatprep.subr.bf16.mxu0 0
    %105 = vmatpush2.bf16.msra.mxu0 0
    %106 = vmatprep.subr.bf16.mxu0 0
    %107 = vmatpush2.bf16.msra.mxu0 0
    %108 = vmatprep.mubr.bf16.mxu0 0
    %109 = vmatmul.mubr.bf16.gmra.mxu0 %v74
    %v110 = vpop.f32.mrf.mxu0
    %v111 = vadd.f32 %v59, %v110
    %v112 = vpop.f32.mrf.mxu0
    %v113 = vpop.f32.mrf.mxu0
    %v114 = vadd.f32 %v59, %v113
    %v115 = vpop.f32.mrf.mxu0
    %116 = vdwg.mxu0
    %v117 = vld [vmem:[%s3] sm:$0x1]
    %v118 = vld [vmem:[%s4] sm:$0x1]
    %119 = vadd.xlane.f32.xlu0 %v111
    %v120 = vpop.xlane.xlu0 %119
    %121 = vadd.xlane.f32.xlu0 %v114
    %v122 = vpop.xlane.xlu0 %121
    %v123 = vrcp.pop 128.0
    %v124 = vmul.f32 %v120, %v123
    %v125 = vmul.f32 %v122, %v123
    %v126 = vsub.f32 %v111, %v124
    %v127 = vsub.f32 %v114, %v125
    %v128 = vmul.f32 %v126, %v126
    %v129 = vmul.f32 %v127, %v127
    %130 = vadd.xlane.f32.xlu0 %v128
    %v131 = vpop.xlane.xlu0 %130
    %132 = vadd.xlane.f32.xlu0 %v129
    %v133 = vpop.xlane.xlu0 %132
    %v134 = vmul.f32 %v131, %v123
    %v135 = vmul.f32 %v133, %v123
    %v136 = vadd.f32 %v134, 1e-05
    %v137 = vadd.f32 %v135, 1e-05
    %v138 = vrsqrt.pop %v136
    %v139 = vrsqrt.pop %v137
    %v140 = vmul.f32 %v126, %v138
    %v141 = vmul.f32 %v127, %v139
    %v143 = vlaneseq
    %v144 = vshrl.u32 %v143, 7
    %v145 = vsub.s32 0, %v144
    %v146 = vrot.slane %v117, %v145
    %v148 = vmul.f32 %v140, %v146
    %v149 = vmul.f32 %v141, %v146
    %v151 = vlaneseq
    %v152 = vshrl.u32 %v151, 7
    %v153 = vsub.s32 0, %v152
    %v154 = vrot.slane %v118, %v153
    %v156 = vadd.f32 %v148, %v154
    %v157 = vadd.f32 %v149, %v154
    %v158 = vpack.c.bf16 %v157, %v156
    %v160 = vunpack.c.l.b16 %v158
    %v161 = vunpack.c.h.b16 %v158
    %v162 = vpack.c.b16 %v160, %v160
    %v163 = vpack.c.b16 %v161, %v161
    %166 = vst [vmem:[#allocation7] sm:$0xf] %v162
    %167 = vst [vmem:[#allocation7 + $0x4] sm:$0xf] %v163
    // Predicated region
    $region30: #{tpu_custom_call.1} parent=1 // pred_check
      _
    $region31: #{tpu_custom_call.1} parent=1 // pred_check_branch
      %169 = sbr.rel (0) target = $region33
    $region32: #{tpu_custom_call.1} parent=1 // pred_region
      %s171 = ssub.s32 128, 128
      %172 = vsyncadd [#allocation4], %s171
      %s173 = sshll.u32 [#allocation7], 4
      %s174 = int_to_ptr.vmem [resolvable:$true] %s173
      %179 = dma.vmem_to_hbm [thread:$0]  %s174, 128, %s5, [#allocation4], 64, 64, 4
    $region33: #{tpu_custom_call.1} parent=1 // pred_fallthru
      _
    // Predicated region
    $region34: #{tpu_custom_call.1} parent=1 // pred_check
      _
    $region35: #{tpu_custom_call.1} parent=1 // pred_check_branch
      %181 = sbr.rel (0) target = $region37
    $region36: #{tpu_custom_call.1} parent=1 // pred_region
      %182 = dma.done [#allocation4], 128
    $region37: #{tpu_custom_call.1} parent=1 // pred_fallthru
      _
    %183 = vsyncpa [#allocation3], 1
    %184 = vsyncpa [#allocation6], 1
    %185 = vsyncpa [#allocation4], 1

</llo_original>
